<compile_context>
chip_gen: v5e
topology: v5e:2x2
jax: 0.10.0
libtpu: 0.0.40
codegen_flags: <defaults>
</compile_context>

<pallas_src>
import jax
import jax.numpy as jnp
from jax.experimental import pallas as pl
from jax.experimental.pallas import tpu as pltpu


# ---------------------------------------------------------------------------
# Kernel
# ---------------------------------------------------------------------------
def lstm_cell_kernel(xh_ref, c_ref, w_ref, b_ref, h_out_ref, c_out_ref):
    """One hidden tile: fused matmul + gate math.

    xh_ref : (B_pad, K)        fused [x | h], K = d_model + hidden (resident)
    c_ref  : (B_pad, h_tile)   previous cell state tile (f32)
    w_ref  : (K, 4*h_tile)     gate-grouped weight tile (bf16), streamed
    b_ref  : (1, 4*h_tile)     pre-summed bias tile (f32)
    """
    ht = c_ref.shape[1]

    # Single fused matmul on the MXU, f32 accumulation.
    gates = jnp.dot(xh_ref[...], w_ref[...],
                    preferred_element_type=jnp.float32)
    gates = gates + b_ref[...]

    # Lane-aligned (128-multiple) gate slices within this tile.
    i_g = jax.nn.sigmoid(gates[:, 0 * ht:1 * ht])
    f_g = jax.nn.sigmoid(gates[:, 1 * ht:2 * ht])
    o_g = jax.nn.sigmoid(gates[:, 2 * ht:3 * ht])
    c_g = jnp.tanh(gates[:, 3 * ht:4 * ht])

    c_prev = c_ref[...].astype(jnp.float32)
    c_next = f_g * c_prev + i_g * c_g
    h_next = o_g * jnp.tanh(c_next)

    h_out_ref[...] = h_next.astype(h_out_ref.dtype)
    c_out_ref[...] = c_next.astype(c_out_ref.dtype)


# ---------------------------------------------------------------------------
# One-time parameter prep (fuse, pad, gate-group, cast)
# ---------------------------------------------------------------------------
def prep_params(w_i2h, b_i2h, w_h2h, b_h2h, *, h_tile=128,
                weight_dtype=jnp.bfloat16):
    """Returns (w, b) ready for the kernel.

    w_i2h: (D, 4H), w_h2h: (H, 4H), gate order [i, f, o, c] along 4H.
    Output w: (D+H, 4*H_pad) in `weight_dtype`, columns re-grouped so each
    4*h_tile block holds [i, f, o, c] for one contiguous chunk of hidden units.
    Output b: (1, 4*H_pad) f32, same grouping, with b_i2h + b_h2h pre-summed.
    """
    D, four_h = w_i2h.shape
    H = four_h // 4
    H_pad = ((H + h_tile - 1) // h_tile) * h_tile
    K = D + H

    # Fuse the two matmuls: stack weights along K, pre-sum the biases.
    w = jnp.concatenate([w_i2h, w_h2h], axis=0).astype(jnp.float32)  # (K, 4H)
    b = (b_i2h + b_h2h).astype(jnp.float32)                          # (4H,)

    # Split into gates, pad hidden dim to a lane multiple.
    w = w.reshape(K, 4, H)
    b = b.reshape(4, H)
    if H_pad != H:
        w = jnp.pad(w, ((0, 0), (0, 0), (0, H_pad - H)))
        b = jnp.pad(b, ((0, 0), (0, H_pad - H)))

    # Gate-group per hidden tile: column layout [i_blk, f_blk, o_blk, c_blk].
    n_tiles = H_pad // h_tile
    w = (w.reshape(K, 4, n_tiles, h_tile)
           .transpose(0, 2, 1, 3)
           .reshape(K, 4 * H_pad))
    b = (b.reshape(4, n_tiles, h_tile)
           .transpose(1, 0, 2)
           .reshape(1, 4 * H_pad))

    return w.astype(weight_dtype), b


# ---------------------------------------------------------------------------
# Wrapper
# ---------------------------------------------------------------------------
def lstm_cell(x, h, c, w, b, *, h_tile=128):
    """Pallas LSTM cell using prepped (w, b) from prep_params.

    x: (B, D), h/c: (B, H). Returns (h_next, (h_next, c_next)).
    """
    B, D = x.shape
    H = h.shape[1]
    K = w.shape[0]
    H_pad = w.shape[1] // 4
    n_tiles = H_pad // h_tile
    assert K == D + H, "prepped weights do not match input shapes"

    SUB = 8  # f32 sublane multiple
    B_pad = ((B + SUB - 1) // SUB) * SUB

    # Fused [x | h] operand, padded to a full sublane group; cast to the weight
    # compute dtype (bf16) for the MXU bf16 path.
    xh = jnp.concatenate([x, h], axis=1)
    xh = jnp.pad(xh, ((0, B_pad - B), (0, 0))).astype(w.dtype)
    c_p = jnp.pad(c, ((0, B_pad - B), (0, H_pad - H))).astype(jnp.float32)

    out_dtype = x.dtype
    h_next_p, c_next_p = pl.pallas_call(
        lstm_cell_kernel,
        out_shape=(
            jax.ShapeDtypeStruct((B_pad, H_pad), out_dtype),
            jax.ShapeDtypeStruct((B_pad, H_pad), out_dtype),
        ),
        grid_spec=pltpu.PrefetchScalarGridSpec(
            num_scalar_prefetch=0,
            grid=(n_tiles,),
            in_specs=[
                # [x|h] stays VMEM-resident across hidden tiles.
                pl.BlockSpec((B_pad, K), lambda t: (0, 0)),
                # c tile for this chunk of hidden units.
                pl.BlockSpec((B_pad, h_tile), lambda t: (0, t)),
                # Weight tile: streamed + double-buffered by the pipeline.
                pl.BlockSpec((K, 4 * h_tile), lambda t: (0, t)),
                # Pre-summed bias tile.
                pl.BlockSpec((1, 4 * h_tile), lambda t: (0, t)),
            ],
            out_specs=(
                pl.BlockSpec((B_pad, h_tile), lambda t: (0, t)),
                pl.BlockSpec((B_pad, h_tile), lambda t: (0, t)),
            ),
        ),
        compiler_params=pltpu.CompilerParams(
            # Hidden tiles are independent -> shard across TensorCores on v7x.
            dimension_semantics=("parallel",),
            # Explicit limit keeps double-buffering alive on v7x's 64 MiB VMEM
            # while staying well inside v5e/v6e's 128 MiB.
            vmem_limit_bytes=48 * 1024 * 1024,
        ),
    )(xh, c_p, w, b)

    h_next = h_next_p[:B, :H]
    c_next = c_next_p[:B, :H]
    return h_next, (h_next, c_next)


# ---------------------------------------------------------------------------
# Param init (mirrors nn.Linear default init) and pure-JAX reference
# ---------------------------------------------------------------------------
def init_params(key, d_model, hidden_size, dtype=jnp.float32):
    k1, k2, k3, k4 = jax.random.split(key, 4)
    bound_i = 1.0 / (d_model ** 0.5)
    bound_h = 1.0 / (hidden_size ** 0.5)
    w_i2h = jax.random.uniform(k1, (d_model, 4 * hidden_size), dtype,
                               -bound_i, bound_i)
    b_i2h = jax.random.uniform(k2, (4 * hidden_size,), dtype, -bound_i, bound_i)
    w_h2h = jax.random.uniform(k3, (hidden_size, 4 * hidden_size), dtype,
                               -bound_h, bound_h)
    b_h2h = jax.random.uniform(k4, (4 * hidden_size,), dtype, -bound_h, bound_h)
    return w_i2h, b_i2h, w_h2h, b_h2h


def lstm_cell_ref(x, h, c, w_i2h, b_i2h, w_h2h, b_h2h):
    """Pure-JAX reference, same math as the PyTorch module."""
    gates = x @ w_i2h + b_i2h + h @ w_h2h + b_h2h
    H = h.shape[1]
    i_g = jax.nn.sigmoid(gates[:, 0 * H:1 * H])
    f_g = jax.nn.sigmoid(gates[:, 1 * H:2 * H])
    o_g = jax.nn.sigmoid(gates[:, 2 * H:3 * H])
    c_g = jnp.tanh(gates[:, 3 * H:4 * H])
    c_next = f_g * c + i_g * c_g
    h_next = o_g * jnp.tanh(c_next)
    return h_next, c_next


# ---------------------------------------------------------------------------
# Demo + correctness check
# ---------------------------------------------------------------------------
if __name__ == "__main__":
    B, D_MODEL, HIDDEN = 2, 32, 32

    key = jax.random.PRNGKey(0)
    kx, kh, kc, kp = jax.random.split(key, 4)
    x = jax.random.normal(kx, (B, D_MODEL), jnp.float32)
    h0 = jax.random.normal(kh, (B, HIDDEN), jnp.float32)
    c0 = jax.random.normal(kc, (B, HIDDEN), jnp.float32)
    w_i2h, b_i2h, w_h2h, b_h2h = init_params(kp, D_MODEL, HIDDEN)

    # One-time prep: fuse weights/bias, pad hidden, gate-group columns, bf16.
    w, b = prep_params(w_i2h, b_i2h, w_h2h, b_h2h, h_tile=128,
                       weight_dtype=jnp.bfloat16)

    out, (h_next, c_next) = lstm_cell(x, h0, c0, w, b, h_tile=128)
    jax.block_until_ready((out, h_next, c_next))

    # Tight check against a reference using the same bf16 rounding of operands
    # (kernel does bf16 operands with f32 accumulation).
    q = lambda a: a.astype(jnp.bfloat16).astype(jnp.float32)
    h_ref_q, c_ref_q = lstm_cell_ref(q(x), q(h0), c0,
                                     q(w_i2h), b_i2h, q(w_h2h), b_h2h)
    assert jnp.allclose(h_next, h_ref_q, atol=5e-3, rtol=5e-3)
    assert jnp.allclose(c_next, c_ref_q, atol=5e-3, rtol=5e-3)

    # Looser end-to-end check against the exact f32 reference (semantics).
    h_ref, c_ref = lstm_cell_ref(x, h0, c0, w_i2h, b_i2h, w_h2h, b_h2h)
    assert jnp.allclose(h_next, h_ref, atol=3e-2, rtol=3e-2)
    assert jnp.allclose(c_next, c_ref, atol=3e-2, rtol=3e-2)
    assert jnp.allclose(out, h_next)

    print("KERNEL_OK")
</pallas_src>

<mosaic_0001>
module attributes {stable_mosaic.version = 11 : i64} {
  func.func @lstm_cell_kernel(%arg0: i32, %arg1: memref<8x64xbf16, #tpu.memory_space<vmem>>, %arg2: memref<8x128xf32, #tpu.memory_space<vmem>>, %arg3: memref<64x512xbf16, #tpu.memory_space<vmem>>, %arg4: memref<1x512xf32, #tpu.memory_space<vmem>>, %arg5: memref<8x128xf32, #tpu.memory_space<vmem>>, %arg6: memref<8x128xf32, #tpu.memory_space<vmem>>) attributes {dimension_semantics = [#tpu.dimension_semantics<parallel>], iteration_bounds = array<i64: 1>, scalar_prefetch = 0 : i64, scratch_operands = 0 : i64, tpu.core_type = #tpu.core_type<tc>, window_params = [{pipeline_mode = #tpu.pipeline_mode<synchronous>, transform_indices = @transform_0, window_bounds = array<i64: 8, 64>}, {transform_indices = @transform_1, window_bounds = array<i64: 8, 128>}, {transform_indices = @transform_2, window_bounds = array<i64: 64, 512>}, {transform_indices = @transform_3, window_bounds = array<i64: 1, 512>}, {transform_indices = @transform_4, window_bounds = array<i64: 8, 128>}, {transform_indices = @transform_5, window_bounds = array<i64: 8, 128>}]} {
    %c0 = arith.constant 0 : index
    %c0_0 = arith.constant 0 : index
    %0 = vector.load %arg1[%c0, %c0_0] : memref<8x64xbf16, #tpu.memory_space<vmem>>, vector<8x64xbf16>
    %c0_1 = arith.constant 0 : index
    %c0_2 = arith.constant 0 : index
    %1 = vector.load %arg3[%c0_1, %c0_2] : memref<64x512xbf16, #tpu.memory_space<vmem>>, vector<64x512xbf16>
    %cst = arith.constant dense<0.000000e+00> : vector<8x512xf32>
    %2 = tpu.matmul %0, %1, %cst {dimension_numbers = #tpu.dot_dimension_numbers<[1], [0], [0], [1], [0, 0, 1, 1], [], []>} : vector<8x64xbf16>, vector<64x512xbf16>, vector<8x512xf32> -> vector<8x512xf32>
    %c0_3 = arith.constant 0 : index
    %c0_4 = arith.constant 0 : index
    %3 = vector.load %arg4[%c0_3, %c0_4] : memref<1x512xf32, #tpu.memory_space<vmem>>, vector<1x512xf32>
    %4 = vector.broadcast %3 : vector<1x512xf32> to vector<8x512xf32>
    %5 = arith.addf %2, %4 : vector<8x512xf32>
    %6 = vector.extract_strided_slice %5 {offsets = [0, 0], sizes = [8, 128], strides = [1, 1]} : vector<8x512xf32> to vector<8x128xf32>
    %7 = arith.negf %6 : vector<8x128xf32>
    %8 = math.exp %7 : vector<8x128xf32>
    %cst_5 = arith.constant 1.000000e+00 : f32
    %9 = vector.broadcast %cst_5 : f32 to vector<8x128xf32>
    %10 = arith.addf %9, %8 : vector<8x128xf32>
    %11 = arith.divf %9, %10 : vector<8x128xf32>
    %12 = vector.extract_strided_slice %5 {offsets = [0, 128], sizes = [8, 128], strides = [1, 1]} : vector<8x512xf32> to vector<8x128xf32>
    %13 = arith.negf %12 : vector<8x128xf32>
    %14 = math.exp %13 : vector<8x128xf32>
    %cst_6 = arith.constant 1.000000e+00 : f32
    %15 = vector.broadcast %cst_6 : f32 to vector<8x128xf32>
    %16 = arith.addf %15, %14 : vector<8x128xf32>
    %17 = arith.divf %15, %16 : vector<8x128xf32>
    %18 = vector.extract_strided_slice %5 {offsets = [0, 256], sizes = [8, 128], strides = [1, 1]} : vector<8x512xf32> to vector<8x128xf32>
    %19 = arith.negf %18 : vector<8x128xf32>
    %20 = math.exp %19 : vector<8x128xf32>
    %cst_7 = arith.constant 1.000000e+00 : f32
    %21 = vector.broadcast %cst_7 : f32 to vector<8x128xf32>
    %22 = arith.addf %21, %20 : vector<8x128xf32>
    %23 = arith.divf %21, %22 : vector<8x128xf32>
    %24 = vector.extract_strided_slice %5 {offsets = [0, 384], sizes = [8, 128], strides = [1, 1]} : vector<8x512xf32> to vector<8x128xf32>
    %25 = math.tanh %24 : vector<8x128xf32>
    %c0_8 = arith.constant 0 : index
    %c0_9 = arith.constant 0 : index
    %26 = vector.load %arg2[%c0_8, %c0_9] : memref<8x128xf32, #tpu.memory_space<vmem>>, vector<8x128xf32>
    %27 = arith.mulf %17, %26 : vector<8x128xf32>
    %28 = arith.mulf %11, %25 : vector<8x128xf32>
    %29 = arith.addf %27, %28 : vector<8x128xf32>
    %30 = math.tanh %29 : vector<8x128xf32>
    %31 = arith.mulf %23, %30 : vector<8x128xf32>
    %c0_10 = arith.constant 0 : index
    %c0_11 = arith.constant 0 : index
    %32 = vector.load %arg5[%c0_10, %c0_11] : memref<8x128xf32, #tpu.memory_space<vmem>>, vector<8x128xf32>
    tpu.vector_store %arg5[%c0_10, %c0_11], %31 {strides = array<i32>} : memref<8x128xf32, #tpu.memory_space<vmem>>, vector<8x128xf32>,
    %c0_12 = arith.constant 0 : index
    %c0_13 = arith.constant 0 : index
    %33 = vector.load %arg6[%c0_12, %c0_13] : memref<8x128xf32, #tpu.memory_space<vmem>>, vector<8x128xf32>
    tpu.vector_store %arg6[%c0_12, %c0_13], %29 {strides = array<i32>} : memref<8x128xf32, #tpu.memory_space<vmem>>, vector<8x128xf32>,
    return
  }
  func.func @transform_0(%arg0: i32) -> (i32, i32) {
    %c0_i32 = arith.constant 0 : i32
    %c0_i32_0 = arith.constant 0 : i32
    %c0_i32_1 = arith.constant 0 : i32
    return %c0_i32, %c0_i32_0 : i32, i32
  }
  func.func @transform_1(%arg0: i32) -> (i32, i32) {
    %c0_i32 = arith.constant 0 : i32
    %c0_i32_0 = arith.constant 0 : i32
    return %c0_i32, %arg0 : i32, i32
  }
  func.func @transform_2(%arg0: i32) -> (i32, i32) {
    %c0_i32 = arith.constant 0 : i32
    %c0_i32_0 = arith.constant 0 : i32
    return %c0_i32, %arg0 : i32, i32
  }
  func.func @transform_3(%arg0: i32) -> (i32, i32) {
    %c0_i32 = arith.constant 0 : i32
    %c0_i32_0 = arith.constant 0 : i32
    return %c0_i32, %arg0 : i32, i32
  }
  func.func @transform_4(%arg0: i32) -> (i32, i32) {
    %c0_i32 = arith.constant 0 : i32
    %c0_i32_0 = arith.constant 0 : i32
    return %c0_i32, %arg0 : i32, i32
  }
  func.func @transform_5(%arg0: i32) -> (i32, i32) {
    %c0_i32 = arith.constant 0 : i32
    %c0_i32_0 = arith.constant 0 : i32
    return %c0_i32, %arg0 : i32, i32
  }
}

</mosaic_0001>

<llo_original>
// kernel: tpu_custom_call.1
$region0: #{tpu_custom_call.1}
  #allocation0 [shape = 'u32[]', space=smem, size = 0x4, offset = 0x4, fixed_abs, tag = 'smem constant byte address 0x4 - core index']
  #allocation1 [shape = 'u32[72,128]{1,0:T(1,128)}', space=vmem, size = 0x9000, scoped, tag = 'internal scratch']
  %s0 = inlined_call_operand.hbm [shape: bf16[8,64], index: 0, kind: input, shape index: {}]
  %s1 = inlined_call_operand.hbm [shape: f32[8,128], index: 1, kind: input, shape index: {}]
  %s2 = inlined_call_operand.hbm [shape: bf16[64,512], index: 2, kind: input, shape index: {}]
  %s3 = inlined_call_operand.hbm [shape: f32[1,512], index: 3, kind: input, shape index: {}]
  %s4 = inlined_call_operand.hbm [shape: f32[8,128], index: 4, kind: output, shape index: {0}]
  %s5 = inlined_call_operand.hbm [shape: f32[8,128], index: 5, kind: output, shape index: {1}]
  %6 = xla_tuple %s4, %s5
  %s7 = sld [smem:[#allocation0]]
  $region50: #{tpu_custom_call.1} parent=0
    _
  %s9 = ssub.s32 1, %s7
  %s10 = scalar_select 0, %s9, %s7
  $region1: #{tpu_custom_call.1} parent=0
    #allocation2 [shape = 'u8[2048]{0}', space=vmem, size = 0x800, scoped, tag = 'input window, operand 0, single buffered']
    #allocation3 [shape = 's32[1]{0}', space=sflag, size = 0x4, scoped, tag = 'scoped memory for tpu_custom_call.1']
    #allocation4 [shape = 's32[1]{0}', space=sflag, size = 0x4, scoped, tag = 'scoped memory for tpu_custom_call.1']
    #allocation5 [shape = 'u8[4096]{0}', space=vmem, size = 0x1000, scoped, tag = 'input window, operand 1, single buffered']
    #allocation6 [shape = 's32[1]{0}', space=sflag, size = 0x4, scoped, tag = 'scoped memory for tpu_custom_call.1']
    #allocation7 [shape = 'u8[65536]{0}', space=vmem, size = 0x10000, scoped, tag = 'input window, operand 2, single buffered']
    #allocation8 [shape = 'u8[2048]{0}', space=vmem, size = 0x800, scoped, tag = 'input window, operand 3, single buffered']
    #allocation9 [shape = 's32[1]{0}', space=sflag, size = 0x4, scoped, tag = 'scoped memory for tpu_custom_call.1']
    #allocation10 [shape = 'u8[4096]{0}', space=vmem, size = 0x1000, scoped, tag = 'output window, operand 0, single buffered']
    #allocation11 [shape = 'u8[4096]{0}', space=vmem, size = 0x1000, scoped, tag = 'output window, operand 1, single buffered']
    #allocation12 [shape = 's32[1]{0}', space=sflag, size = 0x4, scoped, tag = 'scoped memory for tpu_custom_call.1']
    %11 = vsyncpa [#allocation3], 0
    %12 = vsyncpa [#allocation6], 0
    %13 = vsyncpa [#allocation9], 0
    %14 = vsyncpa [#allocation4], 0
    %15 = vsyncpa [#allocation12], 0
    // Predicated region
    $region2: #{tpu_custom_call.1} parent=1 // pred_check
      _
    $region3: #{tpu_custom_call.1} parent=1 // pred_check_branch
      %17 = sbr.rel (0) target = $region5
    $region4: #{tpu_custom_call.1} parent=1 // pred_region
      %19 = vsyncadd [#allocation3], 0
      %s21 = sshll.u32 %s0, 4
      %s22 = int_to_ptr.hbm [resolvable:$true] %s21
      %s23 = sshll.u32 [#allocation2], 4
      %s24 = int_to_ptr.vmem [resolvable:$true] %s23
      %26 = dma.hbm_to_vmem [thread:$0]  %s22, 64, %s24, [#allocation3]
    $region5: #{tpu_custom_call.1} parent=1 // pred_fallthru
      _
    // Predicated region
    $region6: #{tpu_custom_call.1} parent=1 // pred_check
      _
    $region7: #{tpu_custom_call.1} parent=1 // pred_check_branch
      %28 = sbr.rel (0) target = $region9
    $region8: #{tpu_custom_call.1} parent=1 // pred_region
      %30 = vsyncadd [#allocation6], 0
      %s32 = sshll.u32 %s1, 4
      %s33 = int_to_ptr.hbm [resolvable:$true] %s32
      %s34 = sshll.u32 [#allocation5], 4
      %s35 = int_to_ptr.vmem [resolvable:$true] %s34
      %37 = dma.hbm_to_vmem [thread:$0]  %s33, 128, %s35, [#allocation6]
    $region9: #{tpu_custom_call.1} parent=1 // pred_fallthru
      _
    // Predicated region
    $region10: #{tpu_custom_call.1} parent=1 // pred_check
      _
    $region11: #{tpu_custom_call.1} parent=1 // pred_check_branch
      %39 = sbr.rel (0) target = $region13
    $region12: #{tpu_custom_call.1} parent=1 // pred_region
      %41 = vsyncadd [#allocation6], 0
      %s42 = sshll.u32 %s2, 4
      %s43 = int_to_ptr.hbm [resolvable:$true] %s42
      %s44 = sshll.u32 [#allocation7], 4
      %s45 = int_to_ptr.vmem [resolvable:$true] %s44
      %50 = dma.hbm_to_vmem [thread:$0]  %s43, 2048, %s45, [#allocation6], 256, 256, 16
    $region13: #{tpu_custom_call.1} parent=1 // pred_fallthru
      _
    // Predicated region
    $region14: #{tpu_custom_call.1} parent=1 // pred_check
      _
    $region15: #{tpu_custom_call.1} parent=1 // pred_check_branch
      %52 = sbr.rel (0) target = $region17
    $region16: #{tpu_custom_call.1} parent=1 // pred_region
      %54 = vsyncadd [#allocation9], 0
      %s56 = sshll.u32 %s3, 4
      %s57 = int_to_ptr.hbm [resolvable:$true] %s56
      %s58 = sshll.u32 [#allocation8], 4
      %s59 = int_to_ptr.vmem [resolvable:$true] %s58
      %61 = dma.hbm_to_vmem [thread:$0]  %s57, 64, %s59, [#allocation9]
    $region17: #{tpu_custom_call.1} parent=1 // pred_fallthru
      _
    // Predicated region
    $region18: #{tpu_custom_call.1} parent=1 // pred_check
      _
    $region19: #{tpu_custom_call.1} parent=1 // pred_check_branch
      %63 = sbr.rel (0) target = $region21
    $region20: #{tpu_custom_call.1} parent=1 // pred_region
      %65 = dma.done [#allocation3], 64
    $region21: #{tpu_custom_call.1} parent=1 // pred_fallthru
      _
    // Predicated region
    $region22: #{tpu_custom_call.1} parent=1 // pred_check
      _
    $region23: #{tpu_custom_call.1} parent=1 // pred_check_branch
      %67 = sbr.rel (0) target = $region25
    $region24: #{tpu_custom_call.1} parent=1 // pred_region
      %69 = dma.done [#allocation6], 128
    $region25: #{tpu_custom_call.1} parent=1 // pred_fallthru
      _
    // Predicated region
    $region26: #{tpu_custom_call.1} parent=1 // pred_check
      _
    $region27: #{tpu_custom_call.1} parent=1 // pred_check_branch
      %71 = sbr.rel (0) target = $region29
    $region28: #{tpu_custom_call.1} parent=1 // pred_region
      %73 = dma.done [#allocation6], 2048
    $region29: #{tpu_custom_call.1} parent=1 // pred_fallthru
      _
    // Predicated region
    $region30: #{tpu_custom_call.1} parent=1 // pred_check
      _
    $region31: #{tpu_custom_call.1} parent=1 // pred_check_branch
      %75 = sbr.rel (0) target = $region33
    $region32: #{tpu_custom_call.1} parent=1 // pred_region
      %77 = dma.done [#allocation9], 64
    $region33: #{tpu_custom_call.1} parent=1 // pred_fallthru
      _
    %v79 = vld [vmem:[#allocation2] sm:$0xf]
    %v80 = vld [vmem:[#allocation7] sm:$0xff]
    %v81 = vld [vmem:[#allocation7 + $0x8] sm:$0xff]
    %v82 = vld [vmem:[#allocation7 + $0x10] sm:$0xff]
    %v83 = vld [vmem:[#allocation7 + $0x18] sm:$0xff]
    %v84 = vld [vmem:[#allocation7 + $0x20] sm:$0xff]
    %v85 = vld [vmem:[#allocation7 + $0x28] sm:$0xff]
    %v86 = vld [vmem:[#allocation7 + $0x30] sm:$0xff]
    %v87 = vld [vmem:[#allocation7 + $0x38] sm:$0xff]
    %v88 = vld [vmem:[#allocation7 + $0x40] sm:$0xff]
    %v89 = vld [vmem:[#allocation7 + $0x48] sm:$0xff]
    %v90 = vld [vmem:[#allocation7 + $0x50] sm:$0xff]
    %v91 = vld [vmem:[#allocation7 + $0x58] sm:$0xff]
    %v92 = vld [vmem:[#allocation7 + $0x60] sm:$0xff]
    %v93 = vld [vmem:[#allocation7 + $0x68] sm:$0xff]
    %v94 = vld [vmem:[#allocation7 + $0x70] sm:$0xff]
    %v95 = vld [vmem:[#allocation7 + $0x78] sm:$0xff]
    %v96 = vld [vmem:[#allocation8] sm:$0xf]
    %v98 = vperm.slane %v96, 0
    %v99 = vperm.slane %v96, 1
    %v100 = vperm.slane %v96, 2
    %v101 = vperm.slane %v96, 3
    %v122 = vunpack.c.l.b16 %v80
    %v123 = vunpack.c.h.b16 %v80
    %v124 = vunpack.c.l.b16 %v81
    %v125 = vunpack.c.h.b16 %v81
    %v126 = vunpack.c.l.b16 %v82
    %v127 = vunpack.c.h.b16 %v82
    %v128 = vunpack.c.l.b16 %v83
    %v129 = vunpack.c.h.b16 %v83
    %v130 = vunpack.c.l.b16 %v84
    %v131 = vunpack.c.h.b16 %v84
    %v132 = vunpack.c.l.b16 %v85
    %v133 = vunpack.c.h.b16 %v85
    %v134 = vunpack.c.l.b16 %v86
    %v135 = vunpack.c.h.b16 %v86
    %v136 = vunpack.c.l.b16 %v87
    %v137 = vunpack.c.h.b16 %v87
    %v138 = vunpack.c.l.b16 %v88
    %v139 = vunpack.c.h.b16 %v88
    %v140 = vunpack.c.l.b16 %v89
    %v141 = vunpack.c.h.b16 %v89
    %v142 = vunpack.c.l.b16 %v90
    %v143 = vunpack.c.h.b16 %v90
    %v144 = vunpack.c.l.b16 %v91
    %v145 = vunpack.c.h.b16 %v91
    %v146 = vunpack.c.l.b16 %v92
    %v147 = vunpack.c.h.b16 %v92
    %v148 = vunpack.c.l.b16 %v93
    %v149 = vunpack.c.h.b16 %v93
    %v150 = vunpack.c.l.b16 %v94
    %v151 = vunpack.c.h.b16 %v94
    %v152 = vunpack.c.l.b16 %v95
    %v153 = vunpack.c.h.b16 %v95
    %v154 = vpack.c.b16 %v126, %v122
    %v155 = vpack.c.b16 %v127, %v123
    %v156 = vpack.c.b16 %v128, %v124
    %v157 = vpack.c.b16 %v129, %v125
    %v158 = vpack.c.b16 %v134, %v130
    %v159 = vpack.c.b16 %v135, %v131
    %v160 = vpack.c.b16 %v136, %v132
    %v161 = vpack.c.b16 %v137, %v133
    %v162 = vpack.c.b16 %v142, %v138
    %v163 = vpack.c.b16 %v143, %v139
    %v164 = vpack.c.b16 %v144, %v140
    %v165 = vpack.c.b16 %v145, %v141
    %v166 = vpack.c.b16 %v150, %v146
    %v167 = vpack.c.b16 %v151, %v147
    %v168 = vpack.c.b16 %v152, %v148
    %v169 = vpack.c.b16 %v153, %v149
    %vm186 = vcmask 523264
    %v188 = vsel %vm186, %v79, 0
    %190 = vmatpush.bf16.msra.mxu0 0
    %191 = vmatpush.bf16.msra.mxu0 0
    %192 = vmatpush.bf16.msra.mxu0 0
    %193 = vmatpush.bf16.msra.mxu0 0
    %194 = vmatpush.bf16.msra.mxu0 %v166
    %195 = vmatpush.bf16.msra.mxu0 %v162
    %196 = vmatpush.bf16.msra.mxu0 %v158
    %197 = vmatpush.bf16.msra.mxu0 %v154
    %198 = vmatmul.bf16.gmra.mxu0 %v188
    %v199 = vpop.f32.mrf.mxu0
    %v200 = vadd.f32 %v98, %v199
    %v201 = vpop.f32.mrf.mxu0
    %202 = vdwg.mxu0
    %203 = vmatpush.bf16.msra.mxu0 0
    %204 = vmatpush.bf16.msra.mxu0 0
    %205 = vmatpush.bf16.msra.mxu0 0
    %206 = vmatpush.bf16.msra.mxu0 0
    %207 = vmatpush.bf16.msra.mxu0 %v167
    %208 = vmatpush.bf16.msra.mxu0 %v163
    %209 = vmatpush.bf16.msra.mxu0 %v159
    %210 = vmatpush.bf16.msra.mxu0 %v155
    %211 = vmatmul.bf16.gmra.mxu0 %v188
    %v212 = vpop.f32.mrf.mxu0
    %v213 = vadd.f32 %v99, %v212
    %v214 = vpop.f32.mrf.mxu0
    %215 = vdwg.mxu0
    %216 = vmatpush.bf16.msra.mxu0 0
    %217 = vmatpush.bf16.msra.mxu0 0
    %218 = vmatpush.bf16.msra.mxu0 0
    %219 = vmatpush.bf16.msra.mxu0 0
    %220 = vmatpush.bf16.msra.mxu0 %v168
    %221 = vmatpush.bf16.msra.mxu0 %v164
    %222 = vmatpush.bf16.msra.mxu0 %v160
    %223 = vmatpush.bf16.msra.mxu0 %v156
    %224 = vmatmul.bf16.gmra.mxu0 %v188
    %v225 = vpop.f32.mrf.mxu0
    %v226 = vadd.f32 %v100, %v225
    %v227 = vpop.f32.mrf.mxu0
    %228 = vdwg.mxu0
    %229 = vmatpush.bf16.msra.mxu0 0
    %230 = vmatpush.bf16.msra.mxu0 0
    %231 = vmatpush.bf16.msra.mxu0 0
    %232 = vmatpush.bf16.msra.mxu0 0
    %233 = vmatpush.bf16.msra.mxu0 %v169
    %234 = vmatpush.bf16.msra.mxu0 %v165
    %235 = vmatpush.bf16.msra.mxu0 %v161
    %236 = vmatpush.bf16.msra.mxu0 %v157
    %237 = vmatmul.bf16.gmra.mxu0 %v188
    %v238 = vpop.f32.mrf.mxu0
    %v239 = vadd.f32 %v101, %v238
    %v240 = vpop.f32.mrf.mxu0
    %241 = vdwg.mxu0
    %v242 = vxor.u32 %v200, 2147483648
    %v243 = vmul.f32 %v242, 1.442695
    %v244 = vpow.pop %v243
    %v245 = vadd.f32 %v244, 1.0
    %v246 = vrcp.pop %v245
    %v247 = vmul.f32 %v245, %v246
    %v248 = vsub.f32 1.0, %v247
    %v249 = vmul.f32 %v246, %v248
    %v250 = vadd.f32 %v246, %v249
    %vm251 = vweird.f32 %v245
    %vm252 = vweird.f32 %v246
    %vm253 = vmor %vm251, %vm252
    %v254 = vsel %vm253, %v246, %v250
    %v255 = vand.u32 2147483647, %v245
    %vm256 = vcmp.eq.f32.partialorder %v255, 8.507059e+37
    %v257 = vand.u32 %v245, 2147483648
    %v258 = vor.u32 1.1754944e-38, %v257
    %v259 = vsel %vm256, %v258, %v254
    %v260 = vmul.f32 1.0, %v259
    %v261 = vxor.u32 %v213, 2147483648
    %v262 = vmul.f32 %v261, 1.442695
    %v263 = vpow.pop %v262
    %v264 = vadd.f32 %v263, 1.0
    %v265 = vrcp.pop %v264
    %v266 = vmul.f32 %v264, %v265
    %v267 = vsub.f32 1.0, %v266
    %v268 = vmul.f32 %v265, %v267
    %v269 = vadd.f32 %v265, %v268
    %vm270 = vweird.f32 %v264
    %vm271 = vweird.f32 %v265
    %vm272 = vmor %vm270, %vm271
    %v273 = vsel %vm272, %v265, %v269
    %v274 = vand.u32 2147483647, %v264
    %vm275 = vcmp.eq.f32.partialorder %v274, 8.507059e+37
    %v276 = vand.u32 %v264, 2147483648
    %v277 = vor.u32 1.1754944e-38, %v276
    %v278 = vsel %vm275, %v277, %v273
    %v279 = vmul.f32 1.0, %v278
    %v280 = vxor.u32 %v226, 2147483648
    %v281 = vmul.f32 %v280, 1.442695
    %v282 = vpow.pop %v281
    %v283 = vadd.f32 %v282, 1.0
    %v284 = vrcp.pop %v283
    %v285 = vmul.f32 %v283, %v284
    %v286 = vsub.f32 1.0, %v285
    %v287 = vmul.f32 %v284, %v286
    %v288 = vadd.f32 %v284, %v287
    %vm289 = vweird.f32 %v283
    %vm290 = vweird.f32 %v284
    %vm291 = vmor %vm289, %vm290
    %v292 = vsel %vm291, %v284, %v288
    %v293 = vand.u32 2147483647, %v283
    %vm294 = vcmp.eq.f32.partialorder %v293, 8.507059e+37
    %v295 = vand.u32 %v283, 2147483648
    %v296 = vor.u32 1.1754944e-38, %v295
    %v297 = vsel %vm294, %v296, %v292
    %v298 = vmul.f32 1.0, %v297
    %v299 = vtanh.pop %v239
    %v300 = vld [vmem:[#allocation5] sm:$0xff]
    %v301 = vmul.f32 %v279, %v300
    %v302 = vmul.f32 %v260, %v299
    %v303 = vadd.f32 %v301, %v302
    %v304 = vtanh.pop %v303
    %v305 = vmul.f32 %v298, %v304
    %306 = vst [vmem:[#allocation10] sm:$0xff] %v305
    %307 = vst [vmem:[#allocation11] sm:$0xff] %v303
    // Predicated region
    $region34: #{tpu_custom_call.1} parent=1 // pred_check
      _
    $region35: #{tpu_custom_call.1} parent=1 // pred_check_branch
      %309 = sbr.rel (0) target = $region37
    $region36: #{tpu_custom_call.1} parent=1 // pred_region
      %311 = vsyncadd [#allocation4], 0
      %s313 = sshll.u32 [#allocation10], 4
      %s314 = int_to_ptr.vmem [resolvable:$true] %s313
      %s315 = sshll.u32 %s4, 4
      %s316 = int_to_ptr.hbm [resolvable:$true] %s315
      %318 = dma.vmem_to_hbm [thread:$0]  %s314, 128, %s316, [#allocation4]
    $region37: #{tpu_custom_call.1} parent=1 // pred_fallthru
      _
    // Predicated region
    $region38: #{tpu_custom_call.1} parent=1 // pred_check
      _
    $region39: #{tpu_custom_call.1} parent=1 // pred_check_branch
      %320 = sbr.rel (0) target = $region41
    $region40: #{tpu_custom_call.1} parent=1 // pred_region
      %322 = vsyncadd [#allocation12], 0
      %s324 = sshll.u32 [#allocation11], 4
      %s325 = int_to_ptr.vmem [resolvable:$true] %s324
      %s326 = sshll.u32 %s5, 4
      %s327 = int_to_ptr.hbm [resolvable:$true] %s326
      %329 = dma.vmem_to_hbm [thread:$0]  %s325, 128, %s327, [#allocation12]
    $region41: #{tpu_custom_call.1} parent=1 // pred_fallthru
      _
    // Predicated region
    $region42: #{tpu_custom_call.1} parent=1 // pred_check
      _
    $region43: #{tpu_custom_call.1} parent=1 // pred_check_branch
      %331 = sbr.rel (0) target = $region45
    $region44: #{tpu_custom_call.1} parent=1 // pred_region
      %333 = dma.done [#allocation4], 128
    $region45: #{tpu_custom_call.1} parent=1 // pred_fallthru
      _
    // Predicated region
    $region46: #{tpu_custom_call.1} parent=1 // pred_check
      _
    $region47: #{tpu_custom_call.1} parent=1 // pred_check_branch
      %335 = sbr.rel (0) target = $region49
    $region48: #{tpu_custom_call.1} parent=1 // pred_region
      %337 = dma.done [#allocation12], 128
    $region49: #{tpu_custom_call.1} parent=1 // pred_fallthru
      _
    %338 = vsyncpa [#allocation3], 1
    %339 = vsyncpa [#allocation6], 1
    %340 = vsyncpa [#allocation9], 1
    %341 = vsyncpa [#allocation4], 1
    %342 = vsyncpa [#allocation12], 1

</llo_original>
